<compile_context>
chip_gen: v5e
topology: v5e:2x2
jax: 0.10.0
libtpu: 0.0.40
codegen_flags: <defaults>
</compile_context>

<pallas_src>
import jax
import jax.numpy as jnp
from jax.experimental import pallas as pl
from jax.experimental.pallas import tpu as pltpu

NUM_COMPONENTS = 10
NUM_MIXTURES = 5

_BATCH_TILE = 512  # batch tile used only when B is large enough to grid over


def _matmul_kernel(x_ref, at_ref, o_ref):
    # x_ref: [TB, C], at_ref: [C, M], o_ref: [TB, M]
    o_ref[...] = jnp.dot(
        x_ref[...], at_ref[...], preferred_element_type=jnp.float32
    ).astype(o_ref.dtype)


@jax.jit
def generative_net_forward(components, A):
    """components: [B, num_components]; A: [num_mixtures, num_components].

    Returns components @ A.T  ->  [B, num_mixtures]  (float32).
    """
    B, C = components.shape
    Mx = A.shape[0]
    a_t = jnp.transpose(A)  # [C, Mx]; host-side, once, outside the kernel

    if B <= _BATCH_TILE:
        # Single grid step: all operands (a few KB) live in VMEM for the whole call.
        return pl.pallas_call(
            _matmul_kernel,
            out_shape=jax.ShapeDtypeStruct((B, Mx), jnp.float32),
            in_specs=[
                pl.BlockSpec(memory_space=pltpu.MemorySpace.VMEM),
                pl.BlockSpec(memory_space=pltpu.MemorySpace.VMEM),
            ],
            out_specs=pl.BlockSpec(memory_space=pltpu.MemorySpace.VMEM),
        )(components, a_t)

    # Large batch: grid only over batch tiles ("parallel" -> v7x's two TCs split B);
    # A stays the same block every step (resident, no per-step re-DMA cost of note).
    n_tiles = pl.cdiv(B, _BATCH_TILE)
    Bp = n_tiles * _BATCH_TILE
    x = components if Bp == B else jnp.pad(components, ((0, Bp - B), (0, 0)))
    out = pl.pallas_call(
        _matmul_kernel,
        out_shape=jax.ShapeDtypeStruct((Bp, Mx), jnp.float32),
        grid_spec=pltpu.PrefetchScalarGridSpec(
            num_scalar_prefetch=0,
            grid=(n_tiles,),
            in_specs=[
                pl.BlockSpec((_BATCH_TILE, C), lambda i: (i, 0)),
                pl.BlockSpec((C, Mx), lambda i: (0, 0)),
            ],
            out_specs=pl.BlockSpec((_BATCH_TILE, Mx), lambda i: (i, 0)),
        ),
        compiler_params=pltpu.CompilerParams(
            dimension_semantics=("parallel",)),
    )(x, a_t)
    return out[:B]


def reference_forward(components, A):
    """Pure-JAX reference matching the PyTorch forward."""
    return components @ A.T


if __name__ == "__main__":
    key = jax.random.PRNGKey(0)
    k_a0, k_au, k_x = jax.random.split(key, 3)

    batch_size = 8

    # Module __init__: A = A_base + Uniform(-0.2, 0.2) (parameter built on host).
    A_base = jax.random.normal(k_a0, (NUM_MIXTURES, NUM_COMPONENTS), jnp.float32)
    A = A_base + jax.random.uniform(
        k_au, (NUM_MIXTURES, NUM_COMPONENTS), jnp.float32, -0.2, 0.2)

    components = jax.random.normal(
        k_x, (batch_size, NUM_COMPONENTS), jnp.float32)

    out = generative_net_forward(components, A)
    out = jax.block_until_ready(out)

    ref = reference_forward(components, A)
    assert out.shape == (batch_size, NUM_MIXTURES)
    assert jnp.allclose(out, ref, atol=1e-5, rtol=1e-5)

    print("KERNEL_OK")
</pallas_src>

<mosaic_0001>
module attributes {stable_mosaic.version = 11 : i64} {
  func.func @_matmul_kernel(%arg0: memref<8x10xf32, #tpu.memory_space<vmem>>, %arg1: memref<10x5xf32, #tpu.memory_space<vmem>>, %arg2: memref<8x5xf32, #tpu.memory_space<vmem>>) attributes {dimension_semantics = [], scalar_prefetch = 0 : i64, scratch_operands = 0 : i64, tpu.core_type = #tpu.core_type<tc>} {
    %c0 = arith.constant 0 : index
    %c0_0 = arith.constant 0 : index
    %0 = vector.load %arg0[%c0, %c0_0] : memref<8x10xf32, #tpu.memory_space<vmem>>, vector<8x10xf32>
    %c0_1 = arith.constant 0 : index
    %c0_2 = arith.constant 0 : index
    %1 = vector.load %arg1[%c0_1, %c0_2] : memref<10x5xf32, #tpu.memory_space<vmem>>, vector<10x5xf32>
    %cst = arith.constant dense<0.000000e+00> : vector<8x5xf32>
    %2 = tpu.matmul %0, %1, %cst {dimension_numbers = #tpu.dot_dimension_numbers<[1], [0], [0], [1], [0, 0, 1, 1], [], []>} : vector<8x10xf32>, vector<10x5xf32>, vector<8x5xf32> -> vector<8x5xf32>
    %c0_3 = arith.constant 0 : index
    %c0_4 = arith.constant 0 : index
    %3 = vector.load %arg2[%c0_3, %c0_4] : memref<8x5xf32, #tpu.memory_space<vmem>>, vector<8x5xf32>
    tpu.vector_store %arg2[%c0_3, %c0_4], %2 {strides = array<i32>} : memref<8x5xf32, #tpu.memory_space<vmem>>, vector<8x5xf32>,
    return
  }
}

</mosaic_0001>

<llo_original>
// kernel: generative_net_forward.1
$region0: #{generative_net_forward.1}
  #allocation0 [shape = 'u32[]', space=smem, size = 0x4, offset = 0x4, fixed_abs, tag = 'smem constant byte address 0x4 - core index']
  #allocation1 [shape = 'u32[72,128]{1,0:T(1,128)}', space=vmem, size = 0x9000, scoped, tag = 'internal scratch']
  %s0 = inlined_call_operand.vmem [shape: f32[8,10], index: 0, kind: input, shape index: {}]
  %s1 = inlined_call_operand.vmem [shape: f32[10,5], index: 1, kind: input, shape index: {}]
  %s2 = inlined_call_operand.hbm [shape: f32[8,5], index: 2, kind: output, shape index: {}]
  %s3 = sld [smem:[#allocation0]]
  $region18: #{generative_net_forward.1} parent=0
    _
  %s5 = ssub.s32 1, %s3
  %s6 = scalar_select 0, %s5, %s3
  $region1: #{generative_net_forward.1} parent=0
    #allocation2 [shape = 'u8[4096]{0}', space=vmem, size = 0x1000, scoped, tag = 'output window, operand 0, single buffered']
    #allocation3 [shape = 's32[1]{0}', space=sflag, size = 0x4, scoped, tag = 'scoped memory for generative_net_forward.1']
    %7 = vsyncpa [#allocation3], 0
    // Predicated region
    $region2: #{generative_net_forward.1} parent=1 // pred_check
      _
    $region3: #{generative_net_forward.1} parent=1 // pred_check_branch
      %9 = sbr.rel (0) target = $region5
    $region4: #{generative_net_forward.1} parent=1 // pred_region
      _
    $region5: #{generative_net_forward.1} parent=1 // pred_fallthru
      _
    // Predicated region
    $region6: #{generative_net_forward.1} parent=1 // pred_check
      _
    $region7: #{generative_net_forward.1} parent=1 // pred_check_branch
      %11 = sbr.rel (0) target = $region9
    $region8: #{generative_net_forward.1} parent=1 // pred_region
      _
    $region9: #{generative_net_forward.1} parent=1 // pred_fallthru
      _
    %v12 = vld [vmem:[%s0] sm:$0xff]
    %v13 = vld [vmem:[%s1] sm:$0xff]
    %v14 = vld [vmem:[%s1 + $0x8] sm:$0x3]
    %vm15 = vcmask 80896
    %v17 = vsel %vm15, %v12, 0
    %vm19 = vcmask 1041408
    %v21 = vsel %vm19, %v14, 0
    %23 = vmatpush.msra.mxu0 0.0
    %24 = vmatpush.msra.mxu0 0.0
    %25 = vmatpush.msra.mxu0 0.0
    %26 = vmatpush.msra.mxu0 0.0
    %27 = vmatpush.msra.mxu0 0.0
    %28 = vmatpush.msra.mxu0 0.0
    %29 = vmatpush.msra.mxu0 0.0
    %30 = vmatpush.msra.mxu0 0.0
    %31 = vmatpush.msra.mxu0 0.0
    %32 = vmatpush.msra.mxu0 0.0
    %33 = vmatpush.msra.mxu0 0.0
    %34 = vmatpush.msra.mxu0 0.0
    %35 = vmatpush.msra.mxu0 0.0
    %36 = vmatpush.msra.mxu0 0.0
    %37 = vmatpush.msra.mxu0 %v21
    %38 = vmatpush.msra.mxu0 %v13
    %39 = vmatmul.f32.gmra.mxu0 %v17
    %v40 = vpop.f32.mrf.mxu0
    %v41 = vadd.f32 0.0, %v40
    %42 = vdwg.mxu0
    %vm43 = vcmask 39936
    %44 = vst.msk [vmem:[#allocation2] sm:$0xff] %vm43, %v41
    // Predicated region
    $region10: #{generative_net_forward.1} parent=1 // pred_check
      _
    $region11: #{generative_net_forward.1} parent=1 // pred_check_branch
      %46 = sbr.rel (0) target = $region13
    $region12: #{generative_net_forward.1} parent=1 // pred_region
      %48 = vsyncadd [#allocation3], 0
      %s50 = sshll.u32 [#allocation2], 4
      %s51 = int_to_ptr.vmem [resolvable:$true] %s50
      %s52 = sshll.u32 %s2, 4
      %s53 = int_to_ptr.hbm [resolvable:$true] %s52
      %55 = dma.vmem_to_hbm [thread:$0]  %s51, 128, %s53, [#allocation3]
    $region13: #{generative_net_forward.1} parent=1 // pred_fallthru
      _
    // Predicated region
    $region14: #{generative_net_forward.1} parent=1 // pred_check
      _
    $region15: #{generative_net_forward.1} parent=1 // pred_check_branch
      %57 = sbr.rel (0) target = $region17
    $region16: #{generative_net_forward.1} parent=1 // pred_region
      %59 = dma.done [#allocation3], 128
    $region17: #{generative_net_forward.1} parent=1 // pred_fallthru
      _
    %60 = vsyncpa [#allocation3], 1

</llo_original>
